<compile_context>
chip_gen: v7x
topology: tpu7x:2x2x1
jax: 0.10.0
libtpu: 0.0.40
codegen_flags: <defaults>
</compile_context>

<pallas_src>
import functools
import math

import jax
import jax.numpy as jnp
from jax.experimental import pallas as pl
from jax.experimental.pallas import tpu as pltpu


# ----------------------------- fused encoder kernel ---------------------------------

def _pooling_encoder_kernel(xy_ref, wslab_ref, small_ref, o_ref, *,
                            batch, n_ctx, dim_in, hid):
    f32 = jnp.float32

    xy = xy_ref[...]            # (B*N, dim_in)      -- cat([xc, yc], -1), flattened
    small = small_ref[...]      # (dim_in + 6, H)    -- W1 rows + b1..b4, post_b1, post_b2

    b2 = small[dim_in + 1:dim_in + 2, :]
    b3 = small[dim_in + 2:dim_in + 3, :]
    b4 = small[dim_in + 3:dim_in + 4, :]
    pb1 = small[dim_in + 4:dim_in + 5, :]
    pb2 = small[dim_in + 5:dim_in + 6, :]

    # ---- net_pre layer 1 on the VPU (K = dim_x + dim_y is tiny; avoid MXU outer products)
    h = small[dim_in:dim_in + 1, :]                              # b1, broadcasts to (B*N, H)
    for d in range(dim_in):                                      # static unroll (dim_in == 2)
        h = h + xy[:, d:d + 1] * small[d:d + 1, :]
    h = jnp.maximum(h, 0.0)

    # ---- net_pre layers 2..3 (MXU), weights sliced out of the packed slab (zero cost)
    w2 = wslab_ref[0 * hid:1 * hid, :]
    w3 = wslab_ref[1 * hid:2 * hid, :]
    h = jnp.maximum(jnp.dot(h, w2, preferred_element_type=f32) + b2, 0.0)
    h = jnp.maximum(jnp.dot(h, w3, preferred_element_type=f32) + b3, 0.0)

    # ---- mean over the context axis (mask=None path), BEFORE the last net_pre Linear:
    #      mean(h @ W4 + b4) == mean(h) @ W4 + b4.  Sublane reduce, linear in B*N.
    pooled_h = jnp.sum(h.reshape(batch, n_ctx, hid), axis=1) * (1.0 / n_ctx)   # (B, H)
    # TODO(synk): mask!=None weighted-mean branch not implemented (mask=None path only).

    w4 = wslab_ref[2 * hid:3 * hid, :]
    pooled = jnp.dot(pooled_h, w4, preferred_element_type=f32) + b4            # (B, H)

    # ---- net_post: Linear -> ReLU -> Linear ----
    pw1 = wslab_ref[3 * hid:4 * hid, :]
    pw2 = wslab_ref[4 * hid:5 * hid, :]
    p = jnp.maximum(jnp.dot(pooled, pw1, preferred_element_type=f32) + pb1, 0.0)
    out = jnp.dot(p, pw2, preferred_element_type=f32) + pb2                    # (B, H)
    # TODO(synk): dim_lat branch (chunk -> Normal(mu, sigma)) not implemented (deterministic only).
    # TODO(synk): self_attn=True variant (SelfAttn block) not implemented (module not in spec).

    o_ref[...] = out.astype(o_ref.dtype)


# ----------------------------- wrapper ------------------------------------------------

def pack_params(p):
    """Pack the 13 weight/bias arrays into two contiguous slabs (do this ONCE, not per call)."""
    wslab = jnp.concatenate([p["pre_w2"], p["pre_w3"], p["pre_w4"],
                             p["post_w1"], p["post_w2"]], axis=0)              # (5H, H)
    small = jnp.concatenate([p["pre_w1"],
                             p["pre_b1"], p["pre_b2"], p["pre_b3"], p["pre_b4"],
                             p["post_b1"], p["post_b2"]], axis=0)              # (dim_in+6, H)
    return {"wslab": wslab, "small": small}


def pooling_encoder(packed, xc, yc):
    """Fused Pallas forward of PoolingEncoder (self_attn=False, dim_lat=None, mask=None)."""
    B, N, dim_x = xc.shape
    dim_y = yc.shape[-1]
    dim_in = dim_x + dim_y

    wslab, small = packed["wslab"], packed["small"]
    H = wslab.shape[1]
    assert wslab.shape[0] == 5 * H and small.shape[0] == dim_in + 6

    # cat([xc, yc], -1) flattened to (B*N, dim_in); rows of each batch stay contiguous
    # (row-major reshape) -- the in-kernel (B, N, H) pooling view relies on that.
    xy2d = jnp.concatenate([xc.reshape(B * N, dim_x), yc.reshape(B * N, dim_y)], axis=-1)

    vmem = pl.BlockSpec(memory_space=pltpu.MemorySpace.VMEM)
    kernel = functools.partial(_pooling_encoder_kernel,
                               batch=B, n_ctx=N, dim_in=dim_in, hid=H)

    flops = (2 * B * N * H * dim_in          # first layer (VPU)
             + 2 * 2 * B * N * H * H         # pre_w2, pre_w3
             + B * N * H                     # context-mean reduce
             + 3 * 2 * B * H * H)            # pre_w4, post_w1, post_w2
    bytes_accessed = 4 * (xy2d.size + wslab.size + small.size + B * H)

    return pl.pallas_call(
        kernel,
        out_shape=jax.ShapeDtypeStruct((B, H), jnp.float32),
        in_specs=[vmem, vmem, vmem],
        out_specs=vmem,
        cost_estimate=pl.CostEstimate(flops=flops, transcendentals=0,
                                      bytes_accessed=bytes_accessed),
    )(xy2d, wslab, small)


# ----------------------------- parameter init (synthetic, deterministic) ------------

def _init_linear(key, d_in, d_out):
    kw, kb = jax.random.split(key)
    bound = 1.0 / math.sqrt(d_in)
    w = jax.random.uniform(kw, (d_in, d_out), jnp.float32, -bound, bound)
    b = jax.random.uniform(kb, (1, d_out), jnp.float32, -bound, bound)
    return w, b


def init_params(key, dim_x=1, dim_y=1, dim_hid=32):
    ks = jax.random.split(key, 6)
    p = {}
    # net_pre = build_mlp(dim_x + dim_y, H, H, depth=4): 4 Linears, ReLU between.
    p["pre_w1"], p["pre_b1"] = _init_linear(ks[0], dim_x + dim_y, dim_hid)
    p["pre_w2"], p["pre_b2"] = _init_linear(ks[1], dim_hid, dim_hid)
    p["pre_w3"], p["pre_b3"] = _init_linear(ks[2], dim_hid, dim_hid)
    p["pre_w4"], p["pre_b4"] = _init_linear(ks[3], dim_hid, dim_hid)
    # net_post = build_mlp(H, H, H, depth=2): Linear -> ReLU -> Linear.
    p["post_w1"], p["post_b1"] = _init_linear(ks[4], dim_hid, dim_hid)
    p["post_w2"], p["post_b2"] = _init_linear(ks[5], dim_hid, dim_hid)
    return p


# ----------------------------- pure-JAX reference (for verification) -----------------

def _ref_forward(p, xc, yc):
    xy = jnp.concatenate([xc, yc], -1)
    h = jnp.maximum(xy @ p["pre_w1"] + p["pre_b1"], 0.0)
    h = jnp.maximum(h @ p["pre_w2"] + p["pre_b2"], 0.0)
    h = jnp.maximum(h @ p["pre_w3"] + p["pre_b3"], 0.0)
    s = h @ p["pre_w4"] + p["pre_b4"]
    pooled = s.mean(-2)
    q = jnp.maximum(pooled @ p["post_w1"] + p["post_b1"], 0.0)
    return q @ p["post_w2"] + p["post_b2"]


# ----------------------------- main ---------------------------------------------------

if __name__ == "__main__":
    dim_x, dim_y, dim_hid = 1, 1, 32
    B, N = 2, 8   # N is a multiple of 8 -> clean (B, N, H) sublane layout for the pooling reduce

    key = jax.random.PRNGKey(0)
    k_xc, k_yc, k_p = jax.random.split(key, 3)
    xc = jax.random.normal(k_xc, (B, N, dim_x), jnp.float32)
    yc = jax.random.normal(k_yc, (B, N, dim_y), jnp.float32)
    params = init_params(k_p, dim_x, dim_y, dim_hid)
    packed = pack_params(params)   # pack once; reuse across calls

    out = jax.block_until_ready(pooling_encoder(packed, xc, yc))
    ref = _ref_forward(params, xc, yc)

    assert out.shape == (B, dim_hid), out.shape
    assert jnp.allclose(out, ref, atol=1e-3, rtol=1e-3), float(jnp.max(jnp.abs(out - ref)))
    print("KERNEL_OK")
</pallas_src>

<mosaic_0001>
module attributes {stable_mosaic.version = 11 : i64} {
  func.func @_pooling_encoder_kernel(%arg0: memref<16x2xf32, #tpu.memory_space<vmem>>, %arg1: memref<160x32xf32, #tpu.memory_space<vmem>>, %arg2: memref<8x32xf32, #tpu.memory_space<vmem>>, %arg3: memref<2x32xf32, #tpu.memory_space<vmem>>) attributes {dimension_semantics = [], scalar_prefetch = 0 : i64, scratch_operands = 0 : i64, tpu.core_type = #tpu.core_type<tc>} {
    %c0 = arith.constant 0 : index
    %c0_0 = arith.constant 0 : index
    %0 = vector.load %arg0[%c0, %c0_0] : memref<16x2xf32, #tpu.memory_space<vmem>>, vector<16x2xf32>
    %c0_1 = arith.constant 0 : index
    %c0_2 = arith.constant 0 : index
    %1 = vector.load %arg2[%c0_1, %c0_2] : memref<8x32xf32, #tpu.memory_space<vmem>>, vector<8x32xf32>
    %2 = vector.extract_strided_slice %1 {offsets = [3, 0], sizes = [1, 32], strides = [1, 1]} : vector<8x32xf32> to vector<1x32xf32>
    %3 = vector.extract_strided_slice %1 {offsets = [4, 0], sizes = [1, 32], strides = [1, 1]} : vector<8x32xf32> to vector<1x32xf32>
    %4 = vector.extract_strided_slice %1 {offsets = [5, 0], sizes = [1, 32], strides = [1, 1]} : vector<8x32xf32> to vector<1x32xf32>
    %5 = vector.extract_strided_slice %1 {offsets = [6, 0], sizes = [1, 32], strides = [1, 1]} : vector<8x32xf32> to vector<1x32xf32>
    %6 = vector.extract_strided_slice %1 {offsets = [7, 0], sizes = [1, 32], strides = [1, 1]} : vector<8x32xf32> to vector<1x32xf32>
    %7 = vector.extract_strided_slice %1 {offsets = [2, 0], sizes = [1, 32], strides = [1, 1]} : vector<8x32xf32> to vector<1x32xf32>
    %8 = vector.extract_strided_slice %0 {offsets = [0, 0], sizes = [16, 1], strides = [1, 1]} : vector<16x2xf32> to vector<16x1xf32>
    %9 = vector.extract_strided_slice %1 {offsets = [0, 0], sizes = [1, 32], strides = [1, 1]} : vector<8x32xf32> to vector<1x32xf32>
    %10 = vector.broadcast %8 : vector<16x1xf32> to vector<16x32xf32>
    %11 = vector.broadcast %9 : vector<1x32xf32> to vector<16x32xf32>
    %12 = arith.mulf %10, %11 : vector<16x32xf32>
    %13 = vector.broadcast %7 : vector<1x32xf32> to vector<16x32xf32>
    %14 = arith.addf %13, %12 : vector<16x32xf32>
    %15 = vector.extract_strided_slice %0 {offsets = [0, 1], sizes = [16, 1], strides = [1, 1]} : vector<16x2xf32> to vector<16x1xf32>
    %16 = vector.extract_strided_slice %1 {offsets = [1, 0], sizes = [1, 32], strides = [1, 1]} : vector<8x32xf32> to vector<1x32xf32>
    %17 = vector.broadcast %15 : vector<16x1xf32> to vector<16x32xf32>
    %18 = vector.broadcast %16 : vector<1x32xf32> to vector<16x32xf32>
    %19 = arith.mulf %17, %18 : vector<16x32xf32>
    %20 = arith.addf %14, %19 : vector<16x32xf32>
    %cst = arith.constant 0.000000e+00 : f32
    %21 = vector.broadcast %cst : f32 to vector<16x32xf32>
    %22 = arith.maximumf %20, %21 : vector<16x32xf32>
    %c0_3 = arith.constant 0 : index
    %c0_4 = arith.constant 0 : index
    %23 = vector.load %arg1[%c0_3, %c0_4] : memref<160x32xf32, #tpu.memory_space<vmem>>, vector<32x32xf32>
    %c32 = arith.constant 32 : index
    %c0_5 = arith.constant 0 : index
    %24 = vector.load %arg1[%c32, %c0_5] : memref<160x32xf32, #tpu.memory_space<vmem>>, vector<32x32xf32>
    %cst_6 = arith.constant dense<0.000000e+00> : vector<16x32xf32>
    %25 = tpu.matmul %22, %23, %cst_6 {dimension_numbers = #tpu.dot_dimension_numbers<[1], [0], [0], [1], [0, 0, 1, 1], [], []>} : vector<16x32xf32>, vector<32x32xf32>, vector<16x32xf32> -> vector<16x32xf32>
    %26 = vector.broadcast %2 : vector<1x32xf32> to vector<16x32xf32>
    %27 = arith.addf %25, %26 : vector<16x32xf32>
    %cst_7 = arith.constant 0.000000e+00 : f32
    %28 = vector.broadcast %cst_7 : f32 to vector<16x32xf32>
    %29 = arith.maximumf %27, %28 : vector<16x32xf32>
    %cst_8 = arith.constant dense<0.000000e+00> : vector<16x32xf32>
    %30 = tpu.matmul %29, %24, %cst_8 {dimension_numbers = #tpu.dot_dimension_numbers<[1], [0], [0], [1], [0, 0, 1, 1], [], []>} : vector<16x32xf32>, vector<32x32xf32>, vector<16x32xf32> -> vector<16x32xf32>
    %31 = vector.broadcast %3 : vector<1x32xf32> to vector<16x32xf32>
    %32 = arith.addf %30, %31 : vector<16x32xf32>
    %cst_9 = arith.constant 0.000000e+00 : f32
    %33 = vector.broadcast %cst_9 : f32 to vector<16x32xf32>
    %34 = arith.maximumf %32, %33 : vector<16x32xf32>
    %35 = vector.shape_cast %34 : vector<16x32xf32> to vector<2x8x32xf32>
    %cst_10 = arith.constant dense<0.000000e+00> : vector<2x32xf32>
    %36 = vector.multi_reduction <add>, %35, %cst_10 [1] : vector<2x8x32xf32> to vector<2x32xf32>
    %cst_11 = arith.constant 1.250000e-01 : f32
    %37 = vector.broadcast %cst_11 : f32 to vector<2x32xf32>
    %38 = arith.mulf %36, %37 : vector<2x32xf32>
    %c64 = arith.constant 64 : index
    %c0_12 = arith.constant 0 : index
    %39 = vector.load %arg1[%c64, %c0_12] : memref<160x32xf32, #tpu.memory_space<vmem>>, vector<32x32xf32>
    %cst_13 = arith.constant dense<0.000000e+00> : vector<2x32xf32>
    %40 = tpu.matmul %38, %39, %cst_13 {dimension_numbers = #tpu.dot_dimension_numbers<[1], [0], [0], [1], [0, 0, 1, 1], [], []>} : vector<2x32xf32>, vector<32x32xf32>, vector<2x32xf32> -> vector<2x32xf32>
    %41 = vector.broadcast %4 : vector<1x32xf32> to vector<2x32xf32>
    %42 = arith.addf %40, %41 : vector<2x32xf32>
    %c96 = arith.constant 96 : index
    %c0_14 = arith.constant 0 : index
    %43 = vector.load %arg1[%c96, %c0_14] : memref<160x32xf32, #tpu.memory_space<vmem>>, vector<32x32xf32>
    %c128 = arith.constant 128 : index
    %c0_15 = arith.constant 0 : index
    %44 = vector.load %arg1[%c128, %c0_15] : memref<160x32xf32, #tpu.memory_space<vmem>>, vector<32x32xf32>
    %cst_16 = arith.constant dense<0.000000e+00> : vector<2x32xf32>
    %45 = tpu.matmul %42, %43, %cst_16 {dimension_numbers = #tpu.dot_dimension_numbers<[1], [0], [0], [1], [0, 0, 1, 1], [], []>} : vector<2x32xf32>, vector<32x32xf32>, vector<2x32xf32> -> vector<2x32xf32>
    %46 = vector.broadcast %5 : vector<1x32xf32> to vector<2x32xf32>
    %47 = arith.addf %45, %46 : vector<2x32xf32>
    %cst_17 = arith.constant 0.000000e+00 : f32
    %48 = vector.broadcast %cst_17 : f32 to vector<2x32xf32>
    %49 = arith.maximumf %47, %48 : vector<2x32xf32>
    %cst_18 = arith.constant dense<0.000000e+00> : vector<2x32xf32>
    %50 = tpu.matmul %49, %44, %cst_18 {dimension_numbers = #tpu.dot_dimension_numbers<[1], [0], [0], [1], [0, 0, 1, 1], [], []>} : vector<2x32xf32>, vector<32x32xf32>, vector<2x32xf32> -> vector<2x32xf32>
    %51 = vector.broadcast %6 : vector<1x32xf32> to vector<2x32xf32>
    %52 = arith.addf %50, %51 : vector<2x32xf32>
    %c0_19 = arith.constant 0 : index
    %c0_20 = arith.constant 0 : index
    %53 = vector.load %arg3[%c0_19, %c0_20] : memref<2x32xf32, #tpu.memory_space<vmem>>, vector<2x32xf32>
    tpu.vector_store %arg3[%c0_19, %c0_20], %52 {strides = array<i32>} : memref<2x32xf32, #tpu.memory_space<vmem>>, vector<2x32xf32>,
    return
  }
}

</mosaic_0001>

<llo_original>
// kernel: tpu_custom_call.1
$region0: #{tpu_custom_call.1}
  #allocation0 [shape = 'u32[]', space=smem, size = 0x4, offset = 0x4, fixed_abs, tag = 'smem constant byte address 0x4 - core index']
  #allocation1 [shape = 'u32[144,128]{1,0:T(1,128)}', space=vmem, size = 0x12000, scoped, tag = 'internal scratch']
  %s0 = inlined_call_operand.vmem [shape: f32[16,2], index: 0, kind: input, shape index: {}]
  %s1 = inlined_call_operand.vmem [shape: f32[160,32], index: 1, kind: input, shape index: {}]
  %s2 = inlined_call_operand.vmem [shape: f32[8,32], index: 2, kind: input, shape index: {}]
  %s3 = inlined_call_operand.hbm [shape: f32[2,32], index: 3, kind: output, shape index: {}]
  %s4 = sld [smem:[#allocation0]]
  $region22: #{tpu_custom_call.1} parent=0
    _
  %s6 = ssub.s32 1, %s4
  %s7 = scalar_select 0, %s6, %s4
  $region1: #{tpu_custom_call.1} parent=0
    #allocation2 [shape = 'u8[1024]{0}', space=vmem, size = 0x400, scoped, tag = 'output window, operand 0, single buffered']
    #allocation3 [shape = 's32[1]{0}', space=sflag, size = 0x4, scoped, tag = 'scoped memory for tpu_custom_call.1']
    %8 = vsyncpa [#allocation3], 0
    // Predicated region
    $region2: #{tpu_custom_call.1} parent=1 // pred_check
      _
    $region3: #{tpu_custom_call.1} parent=1 // pred_check_branch
      %10 = sbr.rel (0) target = $region5
    $region4: #{tpu_custom_call.1} parent=1 // pred_region
      _
    $region5: #{tpu_custom_call.1} parent=1 // pred_fallthru
      _
    // Predicated region
    $region6: #{tpu_custom_call.1} parent=1 // pred_check
      _
    $region7: #{tpu_custom_call.1} parent=1 // pred_check_branch
      %12 = sbr.rel (0) target = $region9
    $region8: #{tpu_custom_call.1} parent=1 // pred_region
      _
    $region9: #{tpu_custom_call.1} parent=1 // pred_fallthru
      _
    // Predicated region
    $region10: #{tpu_custom_call.1} parent=1 // pred_check
      _
    $region11: #{tpu_custom_call.1} parent=1 // pred_check_branch
      %14 = sbr.rel (0) target = $region13
    $region12: #{tpu_custom_call.1} parent=1 // pred_region
      _
    $region13: #{tpu_custom_call.1} parent=1 // pred_fallthru
      _
    %v15 = vld [vmem:[%s0] sm:$0xff]
    %v16 = vld [vmem:[%s0 + $0x8] sm:$0xff]
    %v17 = vld [vmem:[%s2] sm:$0xff]
    %19 = vset.pattern.permute.xlu0 0
    %20 = vperm.xlu0 %19, %v15
    %v21 = vpop.permute.xlu0 %20
    %24 = vset.pattern.permute.xlu0 0
    %25 = vperm.xlu0 %24, %v16
    %v26 = vpop.permute.xlu0 %25
    %v28 = vlaneseq
    %v29 = vshrl.u32 %v28, 7
    %v30 = vsub.s32 0, %v29
    %v31 = vrot.slane %v17, %v30
    %v32 = vmul.f32 %v21, %v31
    %v33 = vmul.f32 %v26, %v31
    %v34 = vlaneseq
    %v35 = vshrl.u32 %v34, 7
    %v36 = vsub.s32 2, %v35
    %v37 = vrot.slane %v17, %v36
    %v38 = vadd.f32 %v37, %v32
    %v39 = vadd.f32 %v37, %v33
    %40 = vset.pattern.permute.xlu0 1
    %41 = vperm.xlu0 %40, %v15
    %v42 = vpop.permute.xlu0 %41
    %44 = vset.pattern.permute.xlu0 1
    %45 = vperm.xlu0 %44, %v16
    %v46 = vpop.permute.xlu0 %45
    %v48 = vlaneseq
    %v49 = vshrl.u32 %v48, 7
    %v50 = vsub.s32 1, %v49
    %v51 = vrot.slane %v17, %v50
    %v52 = vmul.f32 %v42, %v51
    %v53 = vmul.f32 %v46, %v51
    %v54 = vadd.f32 %v38, %v52
    %v55 = vadd.f32 %v39, %v53
    %v56 = vmax.f32 %v54, 0.0
    %v57 = vmax.f32 %v55, 0.0
    %v58 = vld [vmem:[%s1] sm:$0xff]
    %v59 = vld [vmem:[%s1 + $0x8] sm:$0xff]
    %v60 = vld [vmem:[%s1 + $0x10] sm:$0xff]
    %v61 = vld [vmem:[%s1 + $0x18] sm:$0xff]
    %v62 = vld [vmem:[%s1 + $0x20] sm:$0xff]
    %v63 = vld [vmem:[%s1 + $0x28] sm:$0xff]
    %v64 = vld [vmem:[%s1 + $0x30] sm:$0xff]
    %v65 = vld [vmem:[%s1 + $0x38] sm:$0xff]
    %v66 = vlaneseq
    %v67 = vshrl.u32 %v66, 7
    %v68 = vsub.s32 3, %v67
    %v69 = vrot.slane %v17, %v68
    %vm70 = vcmask 261120
    %v72 = vsel %vm70, %v56, 0
    %v75 = vsel %vm70, %v57, 0
    %77 = vmatprep.subr.mxu0 0.0
    %78 = vmatpush1.msra.mxu0 %v58
    %79 = vmatprep.subr.mxu0 0.0
    %80 = vmatpush1.msra.mxu0 %v59
    %81 = vmatprep.subr.mxu0 0.0
    %82 = vmatpush1.msra.mxu0 %v60
    %83 = vmatprep.subr.mxu0 0.0
    %84 = vmatpush1.msra.mxu0 %v61
    %85 = vmatprep.subr.mxu0 0.0
    %86 = vmatpush1.msra.mxu0 0.0
    %87 = vmatprep.subr.mxu0 0.0
    %88 = vmatpush1.msra.mxu0 0.0
    %89 = vmatprep.subr.mxu0 0.0
    %90 = vmatpush1.msra.mxu0 0.0
    %91 = vmatprep.subr.mxu0 0.0
    %92 = vmatpush1.msra.mxu0 0.0
    %93 = vmatprep.subr.mxu0 0.0
    %94 = vmatpush1.msra.mxu0 0.0
    %95 = vmatprep.subr.mxu0 0.0
    %96 = vmatpush1.msra.mxu0 0.0
    %97 = vmatprep.subr.mxu0 0.0
    %98 = vmatpush1.msra.mxu0 0.0
    %99 = vmatprep.subr.mxu0 0.0
    %100 = vmatpush1.msra.mxu0 0.0
    %101 = vmatprep.subr.mxu0 0.0
    %102 = vmatpush1.msra.mxu0 0.0
    %103 = vmatprep.subr.mxu0 0.0
    %104 = vmatpush1.msra.mxu0 0.0
    %105 = vmatprep.subr.mxu0 0.0
    %106 = vmatpush1.msra.mxu0 0.0
    %107 = vmatprep.subr.mxu0 0.0
    %108 = vmatpush1.msra.mxu0 0.0
    %109 = vmatprep.subr.mxu0 0.0
    %110 = vmatpush1.msra.mxu0 0.0
    %111 = vmatprep.subr.mxu0 0.0
    %112 = vmatpush1.msra.mxu0 0.0
    %113 = vmatprep.subr.mxu0 0.0
    %114 = vmatpush1.msra.mxu0 0.0
    %115 = vmatprep.subr.mxu0 0.0
    %116 = vmatpush1.msra.mxu0 0.0
    %117 = vmatprep.subr.mxu0 0.0
    %118 = vmatpush1.msra.mxu0 0.0
    %119 = vmatprep.subr.mxu0 0.0
    %120 = vmatpush1.msra.mxu0 0.0
    %121 = vmatprep.subr.mxu0 0.0
    %122 = vmatpush1.msra.mxu0 0.0
    %123 = vmatprep.subr.mxu0 0.0
    %124 = vmatpush1.msra.mxu0 0.0
    %125 = vmatprep.subr.mxu0 0.0
    %126 = vmatpush1.msra.mxu0 0.0
    %127 = vmatprep.subr.mxu0 0.0
    %128 = vmatpush1.msra.mxu0 0.0
    %129 = vmatprep.subr.mxu0 0.0
    %130 = vmatpush1.msra.mxu0 0.0
    %131 = vmatprep.subr.mxu0 0.0
    %132 = vmatpush1.msra.mxu0 0.0
    %133 = vmatprep.subr.mxu0 0.0
    %134 = vmatpush1.msra.mxu0 0.0
    %135 = vmatprep.subr.mxu0 0.0
    %136 = vmatpush1.msra.mxu0 0.0
    %137 = vmatprep.subr.mxu0 0.0
    %138 = vmatpush1.msra.mxu0 0.0
    %139 = vmatprep.subr.mxu0 0.0
    %140 = vmatpush1.msra.mxu0 0.0
    %141 = vmatprep.mubr.f32.mxu0 0.0
    %142 = vmatmul.mubr.f32.gmra.mrb[0].mxu0 %v72
    %v143 = vpop.f32.mrb[0].mxu0
    %v144 = vadd.f32 %v69, %v143
    %v145 = vpop.f32.mrb[0].mxu0
    %146 = vmatprep.mubr.f32.mxu0 0.0
    %147 = vmatmul.mubr.f32.gmra.mrb[0].mxu0 %v75
    %v148 = vpop.f32.mrb[0].mxu0
    %v149 = vadd.f32 %v69, %v148
    %v150 = vpop.f32.mrb[0].mxu0
    %151 = vdwg.mxu0
    %v152 = vmax.f32 %v144, 0.0
    %v153 = vmax.f32 %v149, 0.0
    %v154 = vlaneseq
    %v155 = vshrl.u32 %v154, 7
    %v156 = vsub.s32 4, %v155
    %v157 = vrot.slane %v17, %v156
    %v159 = vsel %vm70, %v152, 0
    %v162 = vsel %vm70, %v153, 0
    %164 = vmatprep.subr.mxu0 0.0
    %165 = vmatpush1.msra.mxu0 %v62
    %166 = vmatprep.subr.mxu0 0.0
    %167 = vmatpush1.msra.mxu0 %v63
    %168 = vmatprep.subr.mxu0 0.0
    %169 = vmatpush1.msra.mxu0 %v64
    %170 = vmatprep.subr.mxu0 0.0
    %171 = vmatpush1.msra.mxu0 %v65
    %172 = vmatprep.subr.mxu0 0.0
    %173 = vmatpush1.msra.mxu0 0.0
    %174 = vmatprep.subr.mxu0 0.0
    %175 = vmatpush1.msra.mxu0 0.0
    %176 = vmatprep.subr.mxu0 0.0
    %177 = vmatpush1.msra.mxu0 0.0
    %178 = vmatprep.subr.mxu0 0.0
    %179 = vmatpush1.msra.mxu0 0.0
    %180 = vmatprep.subr.mxu0 0.0
    %181 = vmatpush1.msra.mxu0 0.0
    %182 = vmatprep.subr.mxu0 0.0
    %183 = vmatpush1.msra.mxu0 0.0
    %184 = vmatprep.subr.mxu0 0.0
    %185 = vmatpush1.msra.mxu0 0.0
    %186 = vmatprep.subr.mxu0 0.0
    %187 = vmatpush1.msra.mxu0 0.0
    %188 = vmatprep.subr.mxu0 0.0
    %189 = vmatpush1.msra.mxu0 0.0
    %190 = vmatprep.subr.mxu0 0.0
    %191 = vmatpush1.msra.mxu0 0.0
    %192 = vmatprep.subr.mxu0 0.0
    %193 = vmatpush1.msra.mxu0 0.0
    %194 = vmatprep.subr.mxu0 0.0
    %195 = vmatpush1.msra.mxu0 0.0
    %196 = vmatprep.subr.mxu0 0.0
    %197 = vmatpush1.msra.mxu0 0.0
    %198 = vmatprep.subr.mxu0 0.0
    %199 = vmatpush1.msra.mxu0 0.0
    %200 = vmatprep.subr.mxu0 0.0
    %201 = vmatpush1.msra.mxu0 0.0
    %202 = vmatprep.subr.mxu0 0.0
    %203 = vmatpush1.msra.mxu0 0.0
    %204 = vmatprep.subr.mxu0 0.0
    %205 = vmatpush1.msra.mxu0 0.0
    %206 = vmatprep.subr.mxu0 0.0
    %207 = vmatpush1.msra.mxu0 0.0
    %208 = vmatprep.subr.mxu0 0.0
    %209 = vmatpush1.msra.mxu0 0.0
    %210 = vmatprep.subr.mxu0 0.0
    %211 = vmatpush1.msra.mxu0 0.0
    %212 = vmatprep.subr.mxu0 0.0
    %213 = vmatpush1.msra.mxu0 0.0
    %214 = vmatprep.subr.mxu0 0.0
    %215 = vmatpush1.msra.mxu0 0.0
    %216 = vmatprep.subr.mxu0 0.0
    %217 = vmatpush1.msra.mxu0 0.0
    %218 = vmatprep.subr.mxu0 0.0
    %219 = vmatpush1.msra.mxu0 0.0
    %220 = vmatprep.subr.mxu0 0.0
    %221 = vmatpush1.msra.mxu0 0.0
    %222 = vmatprep.subr.mxu0 0.0
    %223 = vmatpush1.msra.mxu0 0.0
    %224 = vmatprep.subr.mxu0 0.0
    %225 = vmatpush1.msra.mxu0 0.0
    %226 = vmatprep.subr.mxu0 0.0
    %227 = vmatpush1.msra.mxu0 0.0
    %228 = vmatprep.mubr.f32.mxu0 0.0
    %229 = vmatmul.mubr.f32.gmra.mrb[0].mxu0 %v159
    %v230 = vpop.f32.mrb[0].mxu0
    %v231 = vadd.f32 %v157, %v230
    %v232 = vpop.f32.mrb[0].mxu0
    %233 = vmatprep.mubr.f32.mxu0 0.0
    %234 = vmatmul.mubr.f32.gmra.mrb[0].mxu0 %v162
    %v235 = vpop.f32.mrb[0].mxu0
    %v236 = vadd.f32 %v157, %v235
    %v237 = vpop.f32.mrb[0].mxu0
    %238 = vdwg.mxu0
    %v239 = vmax.f32 %v231, 0.0
    %v240 = vmax.f32 %v236, 0.0
    %v241 = vsel %vm70, %v239, 0.0
    %v242 = vrot.slane %v241, 4
    %v243 = vadd.f32 %v241, %v242
    %v244 = vrot.slane %v243, 2
    %v245 = vadd.f32 %v243, %v244
    %v246 = vrot.slane %v245, 1
    %v247 = vadd.f32 %v245, %v246
    %v248 = vsel %vm70, %v240, 0.0
    %v249 = vrot.slane %v248, 4
    %v250 = vadd.f32 %v248, %v249
    %v251 = vrot.slane %v250, 2
    %v252 = vadd.f32 %v250, %v251
    %v253 = vrot.slane %v252, 1
    %v254 = vadd.f32 %v252, %v253
    %v255 = vmul.f32 %v247, 0.125
    %v256 = vmul.f32 %v254, 0.125
    %v257 = vld [vmem:[%s1 + $0x40] sm:$0xff]
    %v258 = vld [vmem:[%s1 + $0x48] sm:$0xff]
    %v259 = vld [vmem:[%s1 + $0x50] sm:$0xff]
    %v260 = vld [vmem:[%s1 + $0x58] sm:$0xff]
    %v261 = vlaneseq
    %v262 = vshrl.u32 %v261, 7
    %v263 = vsub.s32 5, %v262
    %v264 = vrot.slane %v17, %v263
    %vm267 = vcmask 1041409
    %v268 = vsel %vm267, %v256, %v255
    %v269 = vsel %vm70, %v268, 0
    %271 = vmatprep.subr.mxu0 0.0
    %272 = vmatpush1.msra.mxu0 %v257
    %273 = vmatprep.subr.mxu0 0.0
    %274 = vmatpush1.msra.mxu0 %v258
    %275 = vmatprep.subr.mxu0 0.0
    %276 = vmatpush1.msra.mxu0 %v259
    %277 = vmatprep.subr.mxu0 0.0
    %278 = vmatpush1.msra.mxu0 %v260
    %279 = vmatprep.subr.mxu0 0.0
    %280 = vmatpush1.msra.mxu0 0.0
    %281 = vmatprep.subr.mxu0 0.0
    %282 = vmatpush1.msra.mxu0 0.0
    %283 = vmatprep.subr.mxu0 0.0
    %284 = vmatpush1.msra.mxu0 0.0
    %285 = vmatprep.subr.mxu0 0.0
    %286 = vmatpush1.msra.mxu0 0.0
    %287 = vmatprep.subr.mxu0 0.0
    %288 = vmatpush1.msra.mxu0 0.0
    %289 = vmatprep.subr.mxu0 0.0
    %290 = vmatpush1.msra.mxu0 0.0
    %291 = vmatprep.subr.mxu0 0.0
    %292 = vmatpush1.msra.mxu0 0.0
    %293 = vmatprep.subr.mxu0 0.0
    %294 = vmatpush1.msra.mxu0 0.0
    %295 = vmatprep.subr.mxu0 0.0
    %296 = vmatpush1.msra.mxu0 0.0
    %297 = vmatprep.subr.mxu0 0.0
    %298 = vmatpush1.msra.mxu0 0.0
    %299 = vmatprep.subr.mxu0 0.0
    %300 = vmatpush1.msra.mxu0 0.0
    %301 = vmatprep.subr.mxu0 0.0
    %302 = vmatpush1.msra.mxu0 0.0
    %303 = vmatprep.subr.mxu0 0.0
    %304 = vmatpush1.msra.mxu0 0.0
    %305 = vmatprep.subr.mxu0 0.0
    %306 = vmatpush1.msra.mxu0 0.0
    %307 = vmatprep.subr.mxu0 0.0
    %308 = vmatpush1.msra.mxu0 0.0
    %309 = vmatprep.subr.mxu0 0.0
    %310 = vmatpush1.msra.mxu0 0.0
    %311 = vmatprep.subr.mxu0 0.0
    %312 = vmatpush1.msra.mxu0 0.0
    %313 = vmatprep.subr.mxu0 0.0
    %314 = vmatpush1.msra.mxu0 0.0
    %315 = vmatprep.subr.mxu0 0.0
    %316 = vmatpush1.msra.mxu0 0.0
    %317 = vmatprep.subr.mxu0 0.0
    %318 = vmatpush1.msra.mxu0 0.0
    %319 = vmatprep.subr.mxu0 0.0
    %320 = vmatpush1.msra.mxu0 0.0
    %321 = vmatprep.subr.mxu0 0.0
    %322 = vmatpush1.msra.mxu0 0.0
    %323 = vmatprep.subr.mxu0 0.0
    %324 = vmatpush1.msra.mxu0 0.0
    %325 = vmatprep.subr.mxu0 0.0
    %326 = vmatpush1.msra.mxu0 0.0
    %327 = vmatprep.subr.mxu0 0.0
    %328 = vmatpush1.msra.mxu0 0.0
    %329 = vmatprep.subr.mxu0 0.0
    %330 = vmatpush1.msra.mxu0 0.0
    %331 = vmatprep.subr.mxu0 0.0
    %332 = vmatpush1.msra.mxu0 0.0
    %333 = vmatprep.subr.mxu0 0.0
    %334 = vmatpush1.msra.mxu0 0.0
    %335 = vmatprep.mubr.f32.mxu0 0.0
    %336 = vmatmul.mubr.f32.gmra.mrb[0].mxu0 %v269
    %v337 = vpop.f32.mrb[0].mxu0
    %v338 = vadd.f32 %v264, %v337
    %v339 = vpop.f32.mrb[0].mxu0
    %340 = vdwg.mxu0
    %v341 = vld [vmem:[%s1 + $0x60] sm:$0xff]
    %v342 = vld [vmem:[%s1 + $0x68] sm:$0xff]
    %v343 = vld [vmem:[%s1 + $0x70] sm:$0xff]
    %v344 = vld [vmem:[%s1 + $0x78] sm:$0xff]
    %v345 = vld [vmem:[%s1 + $0x80] sm:$0xff]
    %v346 = vld [vmem:[%s1 + $0x88] sm:$0xff]
    %v347 = vld [vmem:[%s1 + $0x90] sm:$0xff]
    %v348 = vld [vmem:[%s1 + $0x98] sm:$0xff]
    %v349 = vlaneseq
    %v350 = vshrl.u32 %v349, 7
    %v351 = vsub.s32 6, %v350
    %v352 = vrot.slane %v17, %v351
    %v354 = vsel %vm70, %v338, 0
    %356 = vmatprep.subr.mxu0 0.0
    %357 = vmatpush1.msra.mxu0 %v341
    %358 = vmatprep.subr.mxu0 0.0
    %359 = vmatpush1.msra.mxu0 %v342
    %360 = vmatprep.subr.mxu0 0.0
    %361 = vmatpush1.msra.mxu0 %v343
    %362 = vmatprep.subr.mxu0 0.0
    %363 = vmatpush1.msra.mxu0 %v344
    %364 = vmatprep.subr.mxu0 0.0
    %365 = vmatpush1.msra.mxu0 0.0
    %366 = vmatprep.subr.mxu0 0.0
    %367 = vmatpush1.msra.mxu0 0.0
    %368 = vmatprep.subr.mxu0 0.0
    %369 = vmatpush1.msra.mxu0 0.0
    %370 = vmatprep.subr.mxu0 0.0
    %371 = vmatpush1.msra.mxu0 0.0
    %372 = vmatprep.subr.mxu0 0.0
    %373 = vmatpush1.msra.mxu0 0.0
    %374 = vmatprep.subr.mxu0 0.0
    %375 = vmatpush1.msra.mxu0 0.0
    %376 = vmatprep.subr.mxu0 0.0
    %377 = vmatpush1.msra.mxu0 0.0
    %378 = vmatprep.subr.mxu0 0.0
    %379 = vmatpush1.msra.mxu0 0.0
    %380 = vmatprep.subr.mxu0 0.0
    %381 = vmatpush1.msra.mxu0 0.0
    %382 = vmatprep.subr.mxu0 0.0
    %383 = vmatpush1.msra.mxu0 0.0
    %384 = vmatprep.subr.mxu0 0.0
    %385 = vmatpush1.msra.mxu0 0.0
    %386 = vmatprep.subr.mxu0 0.0
    %387 = vmatpush1.msra.mxu0 0.0
    %388 = vmatprep.subr.mxu0 0.0
    %389 = vmatpush1.msra.mxu0 0.0
    %390 = vmatprep.subr.mxu0 0.0
    %391 = vmatpush1.msra.mxu0 0.0
    %392 = vmatprep.subr.mxu0 0.0
    %393 = vmatpush1.msra.mxu0 0.0
    %394 = vmatprep.subr.mxu0 0.0
    %395 = vmatpush1.msra.mxu0 0.0
    %396 = vmatprep.subr.mxu0 0.0
    %397 = vmatpush1.msra.mxu0 0.0
    %398 = vmatprep.subr.mxu0 0.0
    %399 = vmatpush1.msra.mxu0 0.0
    %400 = vmatprep.subr.mxu0 0.0
    %401 = vmatpush1.msra.mxu0 0.0
    %402 = vmatprep.subr.mxu0 0.0
    %403 = vmatpush1.msra.mxu0 0.0
    %404 = vmatprep.subr.mxu0 0.0
    %405 = vmatpush1.msra.mxu0 0.0
    %406 = vmatprep.subr.mxu0 0.0
    %407 = vmatpush1.msra.mxu0 0.0
    %408 = vmatprep.subr.mxu0 0.0
    %409 = vmatpush1.msra.mxu0 0.0
    %410 = vmatprep.subr.mxu0 0.0
    %411 = vmatpush1.msra.mxu0 0.0
    %412 = vmatprep.subr.mxu0 0.0
    %413 = vmatpush1.msra.mxu0 0.0
    %414 = vmatprep.subr.mxu0 0.0
    %415 = vmatpush1.msra.mxu0 0.0
    %416 = vmatprep.subr.mxu0 0.0
    %417 = vmatpush1.msra.mxu0 0.0
    %418 = vmatprep.subr.mxu0 0.0
    %419 = vmatpush1.msra.mxu0 0.0
    %420 = vmatprep.mubr.f32.mxu0 0.0
    %421 = vmatmul.mubr.f32.gmra.mrb[0].mxu0 %v354
    %v422 = vpop.f32.mrb[0].mxu0
    %v423 = vadd.f32 %v352, %v422
    %v424 = vpop.f32.mrb[0].mxu0
    %425 = vdwg.mxu0
    %v426 = vmax.f32 %v423, 0.0
    %v427 = vlaneseq
    %v428 = vshrl.u32 %v427, 7
    %v429 = vsub.s32 7, %v428
    %v430 = vrot.slane %v17, %v429
    %v432 = vsel %vm70, %v426, 0
    %434 = vmatprep.subr.mxu0 0.0
    %435 = vmatpush1.msra.mxu0 %v345
    %436 = vmatprep.subr.mxu0 0.0
    %437 = vmatpush1.msra.mxu0 %v346
    %438 = vmatprep.subr.mxu0 0.0
    %439 = vmatpush1.msra.mxu0 %v347
    %440 = vmatprep.subr.mxu0 0.0
    %441 = vmatpush1.msra.mxu0 %v348
    %442 = vmatprep.subr.mxu0 0.0
    %443 = vmatpush1.msra.mxu0 0.0
    %444 = vmatprep.subr.mxu0 0.0
    %445 = vmatpush1.msra.mxu0 0.0
    %446 = vmatprep.subr.mxu0 0.0
    %447 = vmatpush1.msra.mxu0 0.0
    %448 = vmatprep.subr.mxu0 0.0
    %449 = vmatpush1.msra.mxu0 0.0
    %450 = vmatprep.subr.mxu0 0.0
    %451 = vmatpush1.msra.mxu0 0.0
    %452 = vmatprep.subr.mxu0 0.0
    %453 = vmatpush1.msra.mxu0 0.0
    %454 = vmatprep.subr.mxu0 0.0
    %455 = vmatpush1.msra.mxu0 0.0
    %456 = vmatprep.subr.mxu0 0.0
    %457 = vmatpush1.msra.mxu0 0.0
    %458 = vmatprep.subr.mxu0 0.0
    %459 = vmatpush1.msra.mxu0 0.0
    %460 = vmatprep.subr.mxu0 0.0
    %461 = vmatpush1.msra.mxu0 0.0
    %462 = vmatprep.subr.mxu0 0.0
    %463 = vmatpush1.msra.mxu0 0.0
    %464 = vmatprep.subr.mxu0 0.0
    %465 = vmatpush1.msra.mxu0 0.0
    %466 = vmatprep.subr.mxu0 0.0
    %467 = vmatpush1.msra.mxu0 0.0
    %468 = vmatprep.subr.mxu0 0.0
    %469 = vmatpush1.msra.mxu0 0.0
    %470 = vmatprep.subr.mxu0 0.0
    %471 = vmatpush1.msra.mxu0 0.0
    %472 = vmatprep.subr.mxu0 0.0
    %473 = vmatpush1.msra.mxu0 0.0
    %474 = vmatprep.subr.mxu0 0.0
    %475 = vmatpush1.msra.mxu0 0.0
    %476 = vmatprep.subr.mxu0 0.0
    %477 = vmatpush1.msra.mxu0 0.0
    %478 = vmatprep.subr.mxu0 0.0
    %479 = vmatpush1.msra.mxu0 0.0
    %480 = vmatprep.subr.mxu0 0.0
    %481 = vmatpush1.msra.mxu0 0.0
    %482 = vmatprep.subr.mxu0 0.0
    %483 = vmatpush1.msra.mxu0 0.0
    %484 = vmatprep.subr.mxu0 0.0
    %485 = vmatpush1.msra.mxu0 0.0
    %486 = vmatprep.subr.mxu0 0.0
    %487 = vmatpush1.msra.mxu0 0.0
    %488 = vmatprep.subr.mxu0 0.0
    %489 = vmatpush1.msra.mxu0 0.0
    %490 = vmatprep.subr.mxu0 0.0
    %491 = vmatpush1.msra.mxu0 0.0
    %492 = vmatprep.subr.mxu0 0.0
    %493 = vmatpush1.msra.mxu0 0.0
    %494 = vmatprep.subr.mxu0 0.0
    %495 = vmatpush1.msra.mxu0 0.0
    %496 = vmatprep.subr.mxu0 0.0
    %497 = vmatpush1.msra.mxu0 0.0
    %498 = vmatprep.mubr.f32.mxu0 0.0
    %499 = vmatmul.mubr.f32.gmra.mrb[0].mxu0 %v432
    %v500 = vpop.f32.mrb[0].mxu0
    %v501 = vadd.f32 %v430, %v500
    %v502 = vpop.f32.mrb[0].mxu0
    %503 = vdwg.mxu0
    %vm504 = vcmask 254976
    %505 = vst.msk [vmem:[#allocation2] sm:$0x3] %vm504, %v501
    // Predicated region
    $region14: #{tpu_custom_call.1} parent=1 // pred_check
      _
    $region15: #{tpu_custom_call.1} parent=1 // pred_check_branch
      %507 = sbr.rel (0) target = $region17
    $region16: #{tpu_custom_call.1} parent=1 // pred_region
      %s509 = ssub.s32 32, 32
      %510 = vsyncadd [#allocation3], %s509
      %s512 = sshll.u32 [#allocation2], 4
      %s513 = int_to_ptr.vmem [resolvable:$true] %s512
      %515 = dma.vmem_to_hbm [thread:$0]  %s513, 32, %s3, [#allocation3]
    $region17: #{tpu_custom_call.1} parent=1 // pred_fallthru
      _
    // Predicated region
    $region18: #{tpu_custom_call.1} parent=1 // pred_check
      _
    $region19: #{tpu_custom_call.1} parent=1 // pred_check_branch
      %517 = sbr.rel (0) target = $region21
    $region20: #{tpu_custom_call.1} parent=1 // pred_region
      %518 = dma.done [#allocation3], 32
    $region21: #{tpu_custom_call.1} parent=1 // pred_fallthru
      _
    %519 = vsyncpa [#allocation3], 1

</llo_original>
